<compile_context>
chip_gen: v7x
topology: tpu7x:2x2x1
jax: 0.10.0
libtpu: 0.0.40
codegen_flags: <defaults>
</compile_context>

<pallas_src>
import functools

import numpy as np
import jax
import jax.numpy as jnp
from jax.experimental import pallas as pl
from jax.experimental.pallas import tpu as pltpu


# ---------------------------------------------------------------------------
# Fused Pallas kernel: naive level + ALL NHiTS blocks + residual/forecast carry
# ---------------------------------------------------------------------------
def _shift_left(x, s):
    """x[:, i] -> x[:, i+s] (wrap-around); two static lane slices + one concat."""
    return jnp.concatenate([x[:, s:], x[:, :s]], axis=-1)


def nhits_fused_kernel(y_ref, mask_ref, w1_ref, w23_ref, bias_ref, out_ref, *,
                       pools, hiddens, context_length, prediction_length,
                       naive_level, used_width, out_width):
    C = context_length
    P = prediction_length
    B = y_ref.shape[0]
    n_blocks = len(pools)
    n_ent = n_blocks + (1 if naive_level else 0)

    # static lane offsets inside the packed output slab
    off_fore = 0                       # accumulated forecast        (P lanes)
    off_res = P                        # final residuals (backcast)  (C lanes)
    off_bf = P + C                     # per-entry forecasts         (n_ent * P lanes)
    off_bb = P + C + n_ent * P         # per-entry backcasts         (n_ent * C lanes)

    residuals = y_ref[...]                         # (B, C)  current residuals
    mask = mask_ref[...]                           # (B, C)  loaded ONCE, reused by all blocks
    level = residuals[:, C - 1:C]                  # (B, 1)  last observation

    if naive_level:
        naive_fore = jnp.broadcast_to(level, (B, P))
        forecast = naive_fore
        out_ref[:, off_bf:off_bf + P] = naive_fore
        out_ref[:, off_bb:off_bb + C] = jnp.broadcast_to(level, (B, C))
        ent = 1
    else:
        forecast = jnp.zeros((B, P), jnp.float32)
        ent = 0

    lane_idx = jax.lax.broadcasted_iota(jnp.int32, (B, C), 1)   # hoisted out of the loop

    # static lane offsets into the packed weight slabs
    o1 = 0      # offset in w1 slab
    o23 = 0     # offset in w2|w3 slab
    ob = 0      # offset in bias slab
    for b in range(n_blocks):
        pool = pools[b]
        h0, h1 = hiddens[b]

        # nn.MaxPool1d(kernel_size=pool, stride=pool, ceil_mode=True):
        # shift/max tree leaves the window max at every window-start lane; the lane
        # compaction is folded into w1 (rows at non-window-start lanes are zero), so no
        # cross-lane reductions or column concatenates are needed.
        # TODO(synk): partial (ceil_mode) last window when C % pool != 0 not handled.
        x = residuals
        if pool > 1:
            covered = 1
            while covered < pool:
                step = min(covered, pool - covered)
                x = jnp.maximum(x, _shift_left(x, step))
                covered += step
            # zero the non-window-start lanes (belt-and-braces; their w1 rows are zero)
            x = jnp.where((lane_idx % pool) == 0, x, 0.0)

        w1 = w1_ref[:, o1:o1 + h0]                              # (C, h0) lane-compaction folded in
        b1 = bias_ref[:, ob:ob + h0]                            # (1, h0)
        w2 = w23_ref[0:h0, o23:o23 + h1]                        # (h0, h1)
        b2 = bias_ref[:, ob + h0:ob + h0 + h1]                  # (1, h1)
        w3 = w23_ref[0:h1, o23 + h1:o23 + h1 + C + P]           # (h1, C+P) back|fore fused, interp folded
        b3 = bias_ref[:, ob + h0 + h1:ob + h0 + h1 + C + P]     # (1, C+P)

        # MLP: Linear -> ReLU -> Linear -> ReLU -> fused third Linear (dropout = 0)
        h = jnp.maximum(jnp.dot(x, w1, preferred_element_type=jnp.float32) + b1, 0.0)
        h = jnp.maximum(jnp.dot(h, w2, preferred_element_type=jnp.float32) + b2, 0.0)
        theta = jnp.dot(h, w3, preferred_element_type=jnp.float32) + b3    # (B, C+P) single dot

        backcast = theta[:, :C]
        bfore = theta[:, C:]

        residuals = (residuals - backcast) * mask
        forecast = forecast + bfore

        # store block outputs as soon as they are produced (static lane offsets)
        out_ref[:, off_bf + ent * P:off_bf + (ent + 1) * P] = bfore
        out_ref[:, off_bb + ent * C:off_bb + (ent + 1) * C] = backcast
        ent += 1

        o1 += h0
        o23 += h1 + C + P
        ob += h0 + h1 + C + P

    out_ref[:, off_fore:off_fore + P] = forecast
    out_ref[:, off_res:off_res + C] = residuals
    if out_width > used_width:
        out_ref[:, used_width:out_width] = jnp.zeros((B, out_width - used_width), jnp.float32)


# ---------------------------------------------------------------------------
# Parameter / interpolation-matrix construction (deterministic, in-script)
# ---------------------------------------------------------------------------
def linear_interp_matrix(n_in, n_out):
    """Matrix M (n_in, n_out) s.t. knots @ M == F.interpolate(knots[:,None,:],
    size=n_out, mode='linear') (align_corners=False, PyTorch default)."""
    M = np.zeros((n_in, n_out), dtype=np.float32)
    if n_in == 1:
        M[0, :] = 1.0
        return M
    scale = n_in / n_out
    for i in range(n_out):
        src = max((i + 0.5) * scale - 0.5, 0.0)
        i0 = min(int(np.floor(src)), n_in - 1)
        i1 = min(i0 + 1, n_in - 1)
        lam = src - i0
        M[i0, i] += 1.0 - lam
        M[i1, i] += lam
    return M


def make_block_params(key, n_pooled, hidden, context_length, n_theta):
    """Raw MLP params: Linear(in, h0) -> ReLU -> Linear(h0, h1) -> ReLU -> Linear(h1, out).
    he_uniform weight init (kaiming_uniform_, a=0) + torch-default bias init."""
    in_f = n_pooled                        # covariate/static sizes are 0 in this config
    out_f = context_length + n_theta       # context*len(output_size) + n_theta*sum(output_size)
    ks = jax.random.split(key, 6)

    def lin(kw, kb, fan_in, fan_out):
        wlim = float(np.sqrt(6.0 / fan_in))
        w = jax.random.uniform(kw, (fan_in, fan_out), jnp.float32, -wlim, wlim)
        blim = float(1.0 / np.sqrt(fan_in))
        b = jax.random.uniform(kb, (1, fan_out), jnp.float32, -blim, blim)
        return w, b

    w1, b1 = lin(ks[0], ks[1], in_f, hidden[0])
    w2, b2 = lin(ks[2], ks[3], hidden[0], hidden[1])
    w3, b3 = lin(ks[4], ks[5], hidden[1], out_f)
    return dict(w1=w1, b1=b1, w2=w2, b2=b2, w3=w3, b3=b3)


def _pad_lanes(a, mult=128):
    pad = (-a.shape[-1]) % mult
    if pad:
        a = jnp.concatenate([a, jnp.zeros(a.shape[:-1] + (pad,), a.dtype)], axis=-1)
    return a


# ---------------------------------------------------------------------------
# Full NHiTS forward — one pallas_call, thin JAX glue for packing/unpacking only
# ---------------------------------------------------------------------------
def nhits_forward(blocks, encoder_y, encoder_mask, encoder_x_t, decoder_x_t, x_s,
                  *, context_length, prediction_length, naive_level=True):
    # encoder_y: (B, C, 1); encoder_mask: (B, C)
    # encoder_x_t / decoder_x_t / x_s are unused: covariate & static sizes are 0.
    del encoder_x_t, decoder_x_t, x_s
    assert encoder_y.shape[-1] == 1, "kernel assumes output_size == [1] (n_outputs == 1)"

    y2d = encoder_y[..., 0]                                    # (B, C)
    mask2d = encoder_mask.astype(jnp.float32)                  # (B, C)

    B, C = y2d.shape
    P = prediction_length
    nb = len(blocks)
    n_ent = nb + (1 if naive_level else 0)
    used = P + C + n_ent * (P + C)
    out_width = ((used + 127) // 128) * 128                    # lane-dense output slab

    pools = tuple(int(blk["pool"]) for blk in blocks)
    hiddens = tuple((int(blk["params"]["w1"].shape[1]), int(blk["params"]["w2"].shape[1]))
                    for blk in blocks)
    for pool in pools:
        assert C % pool == 0, "pooling window must divide context_length in this kernel"

    # --- pack all block weights into three lane-dense slabs (3 weight DMAs, not 16) ---
    H = max(max(h0, h1) for (h0, h1) in hiddens)
    w1_parts, w23_parts, bias_parts = [], [], []
    for blk, pool, (h0, h1) in zip(blocks, pools, hiddens):
        p = blk["params"]
        n_theta = int(blk["n_theta"])
        n_pooled = p["w1"].shape[0]
        # fold IdentityBasis interpolation into the third Linear, fuse back|fore columns
        interp = jnp.asarray(linear_interp_matrix(n_theta, P))             # (n_theta, P)
        w3f = jnp.concatenate([p["w3"][:, :C], p["w3"][:, C:] @ interp], axis=1)   # (h1, C+P)
        b3f = jnp.concatenate([p["b3"][:, :C], p["b3"][:, C:] @ interp], axis=1)   # (1, C+P)
        # expand w1 (n_pooled, h0) -> (C, h0): rows at window-start lanes, zeros elsewhere
        w1e = jnp.zeros((C, h0), jnp.float32).at[np.arange(n_pooled) * pool].set(p["w1"])
        w1_parts.append(w1e)
        w2p = jnp.zeros((H, h1), jnp.float32).at[:h0].set(p["w2"])
        w3p = jnp.zeros((H, C + P), jnp.float32).at[:h1].set(w3f)
        w23_parts.append(jnp.concatenate([w2p, w3p], axis=1))
        bias_parts.append(jnp.concatenate([p["b1"], p["b2"], b3f], axis=1))
    w1_slab = _pad_lanes(jnp.concatenate(w1_parts, axis=1))               # (C, 128k)
    w23_slab = _pad_lanes(jnp.concatenate(w23_parts, axis=1))             # (H, 128k)
    bias_slab = _pad_lanes(jnp.concatenate(bias_parts, axis=1))           # (1, 128k)

    # --- batch tiling: single step for small B; >=2 multiple-of-8 steps for large B ---
    if B >= 64:
        BT = min(2048, ((-(-B // 2) + 7) // 8) * 8)   # ~B/2 rounded to 8 -> 2 steps (v7x megacore)
    else:
        BT = B
    Bp = -(-B // BT) * BT
    if Bp != B:
        zp = jnp.zeros((Bp - B, C), jnp.float32)
        y2d = jnp.concatenate([y2d, zp], axis=0)
        mask2d = jnp.concatenate([mask2d, zp], axis=0)

    kernel = functools.partial(
        nhits_fused_kernel, pools=pools, hiddens=hiddens,
        context_length=C, prediction_length=P,
        naive_level=naive_level, used_width=used, out_width=out_width)

    grid = (Bp // BT,)
    row_map = lambda i: (i, 0)
    full_map = lambda i: (0, 0)

    slab = pl.pallas_call(
        kernel,
        out_shape=jax.ShapeDtypeStruct((Bp, out_width), jnp.float32),
        grid=grid,
        in_specs=[pl.BlockSpec((BT, C), row_map),                 # residuals / encoder_y
                  pl.BlockSpec((BT, C), row_map),                 # mask
                  pl.BlockSpec(w1_slab.shape, full_map),          # packed w1 slab
                  pl.BlockSpec(w23_slab.shape, full_map),         # packed w2|w3 slab
                  pl.BlockSpec(bias_slab.shape, full_map)],       # packed bias slab
        out_specs=pl.BlockSpec((BT, out_width), row_map),
        compiler_params=pltpu.CompilerParams(
            dimension_semantics=("parallel",)),
    )(y2d, mask2d, w1_slab, w23_slab, bias_slab)

    slab = slab[:B]

    # --- unpack the slab back into PyTorch-shaped outputs ---
    off = 0
    forecast = slab[:, off:off + P]; off += P                    # accumulated forecast (B, P)
    backcast = slab[:, off:off + C]; off += C                    # final residuals      (B, C)
    fores = slab[:, off:off + n_ent * P].reshape(B, n_ent, P); off += n_ent * P
    backs = slab[:, off:off + n_ent * C].reshape(B, n_ent, C)

    forecast = forecast[:, :, None]                              # (B, P, 1)
    backcast = backcast[:, :, None]                              # (B, C, 1)
    block_forecasts = jnp.transpose(fores, (0, 2, 1))[:, :, None, :]   # (B, P, 1, n_ent)
    block_backcasts = jnp.transpose(backs, (0, 2, 1))[:, :, None, :]   # (B, C, 1, n_ent)
    return forecast, backcast, block_forecasts, block_backcasts


# ---------------------------------------------------------------------------
# Pure-numpy reference of the PyTorch forward (for a structural self-check)
# ---------------------------------------------------------------------------
def nhits_reference_numpy(blocks, encoder_y, encoder_mask, C, P, naive_level):
    y = np.asarray(encoder_y)[..., 0].astype(np.float64)
    mask = np.asarray(encoder_mask).astype(np.float64)
    B = y.shape[0]
    residuals = y
    level = y[:, -1:]
    fores, backs = [], []
    if naive_level:
        forecast = np.repeat(level, P, axis=1)
        fores.append(forecast.copy())
        backs.append(np.repeat(level, C, axis=1))
    else:
        forecast = np.zeros((B, P))
    for blk in blocks:
        p = {k: np.asarray(v, dtype=np.float64) for k, v in blk["params"].items()}
        pool = int(blk["pool"])
        pooled = residuals.reshape(B, C // pool, pool).max(axis=-1)
        h = np.maximum(pooled @ p["w1"] + p["b1"], 0.0)
        h = np.maximum(h @ p["w2"] + p["b2"], 0.0)
        theta = h @ p["w3"] + p["b3"]
        backcast_b = theta[:, :C]
        knots = theta[:, C:]
        interp = linear_interp_matrix(knots.shape[1], P).astype(np.float64)
        bfore = knots @ interp
        residuals = (residuals - backcast_b) * mask
        forecast = forecast + bfore
        fores.append(bfore)
        backs.append(backcast_b)
    return forecast, residuals, fores, backs


# ---------------------------------------------------------------------------
if __name__ == "__main__":
    # model config (small, consistent with the PyTorch module)
    context_length = 16
    prediction_length = 8
    output_size = [1]
    n_blocks = [1, 1]
    hidden_size = [[32, 32], [32, 32]]
    pooling_sizes = [2, 4]
    downsample_frequencies = [2, 1]
    naive_level = True
    B = 2

    key = jax.random.PRNGKey(0)
    k_y, k_p = jax.random.split(key, 2)

    encoder_y = jax.random.normal(k_y, (B, context_length, 1), jnp.float32)
    encoder_mask = jnp.ones((B, context_length), jnp.float32)
    encoder_x_t = jnp.zeros((B, context_length, 0), jnp.float32)
    decoder_x_t = jnp.zeros((B, prediction_length, 0), jnp.float32)
    x_s = jnp.zeros((B, 0), jnp.float32)

    # create_stack equivalent
    blocks = []
    pkeys = jax.random.split(k_p, sum(n_blocks))
    bi = 0
    for i in range(len(n_blocks)):
        for _ in range(n_blocks[i]):
            pool = pooling_sizes[i]
            n_pooled = int(np.ceil(context_length / pool))
            n_theta = max(prediction_length // downsample_frequencies[i], 1)
            params = make_block_params(pkeys[bi], n_pooled, hidden_size[i],
                                       context_length, n_theta)
            blocks.append(dict(params=params, pool=pool, n_theta=n_theta))
            bi += 1

    outs = nhits_forward(blocks, encoder_y, encoder_mask, encoder_x_t, decoder_x_t, x_s,
                         context_length=context_length,
                         prediction_length=prediction_length,
                         naive_level=naive_level)
    jax.block_until_ready(outs)

    forecast, backcast, block_forecasts, block_backcasts = outs
    n_ent = sum(n_blocks) + (1 if naive_level else 0)
    assert forecast.shape == (B, prediction_length, 1)
    assert backcast.shape == (B, context_length, 1)
    assert block_forecasts.shape == (B, prediction_length, 1, n_ent)
    assert block_backcasts.shape == (B, context_length, 1, n_ent)
    assert bool(jnp.all(jnp.isfinite(forecast)))

    # structural self-check against a float64 numpy reference (loose tolerance: the
    # in-kernel matmuls run at the MXU's default precision)
    ref_fore, ref_resid, ref_fores, ref_backs = nhits_reference_numpy(
        blocks, encoder_y, encoder_mask, context_length, prediction_length, naive_level)
    np.testing.assert_allclose(np.asarray(forecast[..., 0]), ref_fore, rtol=5e-2, atol=2e-1)
    np.testing.assert_allclose(np.asarray(backcast[..., 0]), ref_resid, rtol=5e-2, atol=2e-1)
    for e in range(n_ent):
        np.testing.assert_allclose(np.asarray(block_forecasts[:, :, 0, e]), ref_fores[e],
                                   rtol=5e-2, atol=2e-1)
        np.testing.assert_allclose(np.asarray(block_backcasts[:, :, 0, e]), ref_backs[e],
                                   rtol=5e-2, atol=2e-1)

    print("KERNEL_OK")
</pallas_src>

<mosaic_0001>
module attributes {stable_mosaic.version = 11 : i64} {
  func.func @nhits_fused_kernel(%arg0: i32, %arg1: memref<2x16xf32, #tpu.memory_space<vmem>>, %arg2: memref<2x16xf32, #tpu.memory_space<vmem>>, %arg3: memref<16x128xf32, #tpu.memory_space<vmem>>, %arg4: memref<32x128xf32, #tpu.memory_space<vmem>>, %arg5: memref<1x256xf32, #tpu.memory_space<vmem>>, %arg6: memref<2x128xf32, #tpu.memory_space<vmem>>) attributes {dimension_semantics = [#tpu.dimension_semantics<parallel>], iteration_bounds = array<i64: 1>, scalar_prefetch = 0 : i64, scratch_operands = 0 : i64, tpu.core_type = #tpu.core_type<tc>, window_params = [{transform_indices = @transform_0, window_bounds = array<i64: 2, 16>}, {transform_indices = @transform_1, window_bounds = array<i64: 2, 16>}, {pipeline_mode = #tpu.pipeline_mode<synchronous>, transform_indices = @transform_2, window_bounds = array<i64: 16, 128>}, {pipeline_mode = #tpu.pipeline_mode<synchronous>, transform_indices = @transform_3, window_bounds = array<i64: 32, 128>}, {pipeline_mode = #tpu.pipeline_mode<synchronous>, transform_indices = @transform_4, window_bounds = array<i64: 1, 256>}, {transform_indices = @transform_5, window_bounds = array<i64: 2, 128>}]} {
    %c0 = arith.constant 0 : index
    %c0_0 = arith.constant 0 : index
    %0 = vector.load %arg1[%c0, %c0_0] : memref<2x16xf32, #tpu.memory_space<vmem>>, vector<2x16xf32>
    %c0_1 = arith.constant 0 : index
    %c0_2 = arith.constant 0 : index
    %1 = vector.load %arg2[%c0_1, %c0_2] : memref<2x16xf32, #tpu.memory_space<vmem>>, vector<2x16xf32>
    %2 = vector.extract_strided_slice %0 {offsets = [0, 15], sizes = [2, 1], strides = [1, 1]} : vector<2x16xf32> to vector<2x1xf32>
    %3 = vector.shape_cast %2 : vector<2x1xf32> to vector<2x1xf32>
    %4 = vector.broadcast %3 : vector<2x1xf32> to vector<2x8xf32>
    %c0_3 = arith.constant 0 : index
    %c24 = arith.constant 24 : index
    %5 = vector.load %arg6[%c0_3, %c24] : memref<2x128xf32, #tpu.memory_space<vmem>>, vector<2x8xf32>
    tpu.vector_store %arg6[%c0_3, %c24], %4 {strides = array<i32>} : memref<2x128xf32, #tpu.memory_space<vmem>>, vector<2x8xf32>,
    %6 = vector.shape_cast %2 : vector<2x1xf32> to vector<2x1xf32>
    %7 = vector.broadcast %6 : vector<2x1xf32> to vector<2x16xf32>
    %c0_4 = arith.constant 0 : index
    %c48 = arith.constant 48 : index
    %8 = vector.load %arg6[%c0_4, %c48] : memref<2x128xf32, #tpu.memory_space<vmem>>, vector<2x16xf32>
    tpu.vector_store %arg6[%c0_4, %c48], %7 {strides = array<i32>} : memref<2x128xf32, #tpu.memory_space<vmem>>, vector<2x16xf32>,
    %9 = tpu.iota {dimensions = array<i32: 1>} : vector<2x16xi32>
    %10 = vector.extract_strided_slice %0 {offsets = [0, 1], sizes = [2, 15], strides = [1, 1]} : vector<2x16xf32> to vector<2x15xf32>
    %11 = vector.extract_strided_slice %0 {offsets = [0, 0], sizes = [2, 1], strides = [1, 1]} : vector<2x16xf32> to vector<2x1xf32>
    %12 = tpu.concatenate %10, %11 in 1 : vector<2x15xf32>, vector<2x1xf32> -> vector<2x16xf32>
    %13 = arith.maximumf %0, %12 : vector<2x16xf32>
    %c2_i32 = arith.constant 2 : i32
    %c0_i32 = arith.constant 0 : i32
    %14 = arith.cmpi eq, %c2_i32, %c0_i32 : i32
    %c1_i32 = arith.constant 1 : i32
    %15 = arith.select %14, %c1_i32, %c2_i32 : i32
    %16 = vector.broadcast %15 : i32 to vector<2x16xi32>
    %17 = arith.remsi %9, %16 : vector<2x16xi32>
    %c0_i32_5 = arith.constant 0 : i32
    %18 = vector.broadcast %c0_i32_5 : i32 to vector<2x16xi32>
    %19 = arith.cmpi ne, %17, %18 : vector<2x16xi32>
    %c0_i32_6 = arith.constant 0 : i32
    %20 = vector.broadcast %c0_i32_6 : i32 to vector<2x16xi32>
    %21 = arith.cmpi slt, %17, %20 : vector<2x16xi32>
    %c0_i32_7 = arith.constant 0 : i32
    %22 = arith.cmpi slt, %15, %c0_i32_7 : i32
    %23 = vector.broadcast %22 : i1 to vector<2x16xi1>
    %24 = vector.broadcast %23 : vector<2x16xi1> to vector<2x16xi1>
    %25 = arith.xori %21, %24 : vector<2x16xi1>
    %26 = arith.andi %25, %19 : vector<2x16xi1>
    %27 = vector.broadcast %15 : i32 to vector<2x16xi32>
    %28 = arith.addi %17, %27 : vector<2x16xi32>
    %29 = arith.select %26, %28, %17 : vector<2x16xi1>, vector<2x16xi32>
    %c0_i32_8 = arith.constant 0 : i32
    %30 = vector.broadcast %c0_i32_8 : i32 to vector<2x16xi32>
    %31 = arith.cmpi eq, %29, %30 : vector<2x16xi32>
    %cst = arith.constant 0.000000e+00 : f32
    %32 = vector.broadcast %cst : f32 to vector<2x16xf32>
    %33 = arith.select %31, %13, %32 : vector<2x16xi1>, vector<2x16xf32>
    %c0_9 = arith.constant 0 : index
    %c0_10 = arith.constant 0 : index
    %34 = vector.load %arg3[%c0_9, %c0_10] : memref<16x128xf32, #tpu.memory_space<vmem>>, vector<16x32xf32>
    %c0_11 = arith.constant 0 : index
    %c0_12 = arith.constant 0 : index
    %35 = vector.load %arg5[%c0_11, %c0_12] : memref<1x256xf32, #tpu.memory_space<vmem>>, vector<1x32xf32>
    %c0_13 = arith.constant 0 : index
    %c0_14 = arith.constant 0 : index
    %36 = vector.load %arg4[%c0_13, %c0_14] : memref<32x128xf32, #tpu.memory_space<vmem>>, vector<32x32xf32>
    %c0_15 = arith.constant 0 : index
    %c32 = arith.constant 32 : index
    %37 = vector.load %arg5[%c0_15, %c32] : memref<1x256xf32, #tpu.memory_space<vmem>>, vector<1x32xf32>
    %c0_16 = arith.constant 0 : index
    %c32_17 = arith.constant 32 : index
    %38 = vector.load %arg4[%c0_16, %c32_17] : memref<32x128xf32, #tpu.memory_space<vmem>>, vector<32x24xf32>
    %c0_18 = arith.constant 0 : index
    %c64 = arith.constant 64 : index
    %39 = vector.load %arg5[%c0_18, %c64] : memref<1x256xf32, #tpu.memory_space<vmem>>, vector<1x24xf32>
    %cst_19 = arith.constant dense<0.000000e+00> : vector<2x32xf32>
    %40 = tpu.matmul %33, %34, %cst_19 {dimension_numbers = #tpu.dot_dimension_numbers<[1], [0], [0], [1], [0, 0, 1, 1], [], []>} : vector<2x16xf32>, vector<16x32xf32>, vector<2x32xf32> -> vector<2x32xf32>
    %41 = vector.broadcast %35 : vector<1x32xf32> to vector<2x32xf32>
    %42 = arith.addf %40, %41 : vector<2x32xf32>
    %cst_20 = arith.constant 0.000000e+00 : f32
    %43 = vector.broadcast %cst_20 : f32 to vector<2x32xf32>
    %44 = arith.maximumf %42, %43 : vector<2x32xf32>
    %cst_21 = arith.constant dense<0.000000e+00> : vector<2x32xf32>
    %45 = tpu.matmul %44, %36, %cst_21 {dimension_numbers = #tpu.dot_dimension_numbers<[1], [0], [0], [1], [0, 0, 1, 1], [], []>} : vector<2x32xf32>, vector<32x32xf32>, vector<2x32xf32> -> vector<2x32xf32>
    %46 = vector.broadcast %37 : vector<1x32xf32> to vector<2x32xf32>
    %47 = arith.addf %45, %46 : vector<2x32xf32>
    %cst_22 = arith.constant 0.000000e+00 : f32
    %48 = vector.broadcast %cst_22 : f32 to vector<2x32xf32>
    %49 = arith.maximumf %47, %48 : vector<2x32xf32>
    %cst_23 = arith.constant dense<0.000000e+00> : vector<2x24xf32>
    %50 = tpu.matmul %49, %38, %cst_23 {dimension_numbers = #tpu.dot_dimension_numbers<[1], [0], [0], [1], [0, 0, 1, 1], [], []>} : vector<2x32xf32>, vector<32x24xf32>, vector<2x24xf32> -> vector<2x24xf32>
    %51 = vector.broadcast %39 : vector<1x24xf32> to vector<2x24xf32>
    %52 = arith.addf %50, %51 : vector<2x24xf32>
    %53 = vector.extract_strided_slice %52 {offsets = [0, 0], sizes = [2, 16], strides = [1, 1]} : vector<2x24xf32> to vector<2x16xf32>
    %54 = vector.extract_strided_slice %52 {offsets = [0, 16], sizes = [2, 8], strides = [1, 1]} : vector<2x24xf32> to vector<2x8xf32>
    %55 = arith.subf %0, %53 : vector<2x16xf32>
    %56 = arith.mulf %55, %1 : vector<2x16xf32>
    %57 = arith.addf %4, %54 : vector<2x8xf32>
    %c0_24 = arith.constant 0 : index
    %c32_25 = arith.constant 32 : index
    %58 = vector.load %arg6[%c0_24, %c32_25] : memref<2x128xf32, #tpu.memory_space<vmem>>, vector<2x8xf32>
    tpu.vector_store %arg6[%c0_24, %c32_25], %54 {strides = array<i32>} : memref<2x128xf32, #tpu.memory_space<vmem>>, vector<2x8xf32>,
    %c0_26 = arith.constant 0 : index
    %c64_27 = arith.constant 64 : index
    %59 = vector.load %arg6[%c0_26, %c64_27] : memref<2x128xf32, #tpu.memory_space<vmem>>, vector<2x16xf32>
    tpu.vector_store %arg6[%c0_26, %c64_27], %53 {strides = array<i32>} : memref<2x128xf32, #tpu.memory_space<vmem>>, vector<2x16xf32>,
    %60 = vector.extract_strided_slice %56 {offsets = [0, 1], sizes = [2, 15], strides = [1, 1]} : vector<2x16xf32> to vector<2x15xf32>
    %61 = vector.extract_strided_slice %56 {offsets = [0, 0], sizes = [2, 1], strides = [1, 1]} : vector<2x16xf32> to vector<2x1xf32>
    %62 = tpu.concatenate %60, %61 in 1 : vector<2x15xf32>, vector<2x1xf32> -> vector<2x16xf32>
    %63 = arith.maximumf %56, %62 : vector<2x16xf32>
    %64 = vector.extract_strided_slice %63 {offsets = [0, 2], sizes = [2, 14], strides = [1, 1]} : vector<2x16xf32> to vector<2x14xf32>
    %65 = vector.extract_strided_slice %63 {offsets = [0, 0], sizes = [2, 2], strides = [1, 1]} : vector<2x16xf32> to vector<2x2xf32>
    %66 = tpu.concatenate %64, %65 in 1 : vector<2x14xf32>, vector<2x2xf32> -> vector<2x16xf32>
    %67 = arith.maximumf %63, %66 : vector<2x16xf32>
    %c4_i32 = arith.constant 4 : i32
    %c0_i32_28 = arith.constant 0 : i32
    %68 = arith.cmpi eq, %c4_i32, %c0_i32_28 : i32
    %c1_i32_29 = arith.constant 1 : i32
    %69 = arith.select %68, %c1_i32_29, %c4_i32 : i32
    %70 = vector.broadcast %69 : i32 to vector<2x16xi32>
    %71 = arith.remsi %9, %70 : vector<2x16xi32>
    %c0_i32_30 = arith.constant 0 : i32
    %72 = vector.broadcast %c0_i32_30 : i32 to vector<2x16xi32>
    %73 = arith.cmpi ne, %71, %72 : vector<2x16xi32>
    %c0_i32_31 = arith.constant 0 : i32
    %74 = vector.broadcast %c0_i32_31 : i32 to vector<2x16xi32>
    %75 = arith.cmpi slt, %71, %74 : vector<2x16xi32>
    %c0_i32_32 = arith.constant 0 : i32
    %76 = arith.cmpi slt, %69, %c0_i32_32 : i32
    %77 = vector.broadcast %76 : i1 to vector<2x16xi1>
    %78 = vector.broadcast %77 : vector<2x16xi1> to vector<2x16xi1>
    %79 = arith.xori %75, %78 : vector<2x16xi1>
    %80 = arith.andi %79, %73 : vector<2x16xi1>
    %81 = vector.broadcast %69 : i32 to vector<2x16xi32>
    %82 = arith.addi %71, %81 : vector<2x16xi32>
    %83 = arith.select %80, %82, %71 : vector<2x16xi1>, vector<2x16xi32>
    %c0_i32_33 = arith.constant 0 : i32
    %84 = vector.broadcast %c0_i32_33 : i32 to vector<2x16xi32>
    %85 = arith.cmpi eq, %83, %84 : vector<2x16xi32>
    %cst_34 = arith.constant 0.000000e+00 : f32
    %86 = vector.broadcast %cst_34 : f32 to vector<2x16xf32>
    %87 = arith.select %85, %67, %86 : vector<2x16xi1>, vector<2x16xf32>
    %c0_35 = arith.constant 0 : index
    %c32_36 = arith.constant 32 : index
    %88 = vector.load %arg3[%c0_35, %c32_36] : memref<16x128xf32, #tpu.memory_space<vmem>>, vector<16x32xf32>
    %c0_37 = arith.constant 0 : index
    %c88 = arith.constant 88 : index
    %89 = vector.load %arg5[%c0_37, %c88] : memref<1x256xf32, #tpu.memory_space<vmem>>, vector<1x32xf32>
    %c0_38 = arith.constant 0 : index
    %c56 = arith.constant 56 : index
    %90 = vector.load %arg4[%c0_38, %c56] : memref<32x128xf32, #tpu.memory_space<vmem>>, vector<32x32xf32>
    %c0_39 = arith.constant 0 : index
    %c120 = arith.constant 120 : index
    %91 = vector.load %arg5[%c0_39, %c120] : memref<1x256xf32, #tpu.memory_space<vmem>>, vector<1x32xf32>
    %c0_40 = arith.constant 0 : index
    %c88_41 = arith.constant 88 : index
    %92 = vector.load %arg4[%c0_40, %c88_41] : memref<32x128xf32, #tpu.memory_space<vmem>>, vector<32x24xf32>
    %c0_42 = arith.constant 0 : index
    %c152 = arith.constant 152 : index
    %93 = vector.load %arg5[%c0_42, %c152] : memref<1x256xf32, #tpu.memory_space<vmem>>, vector<1x24xf32>
    %cst_43 = arith.constant dense<0.000000e+00> : vector<2x32xf32>
    %94 = tpu.matmul %87, %88, %cst_43 {dimension_numbers = #tpu.dot_dimension_numbers<[1], [0], [0], [1], [0, 0, 1, 1], [], []>} : vector<2x16xf32>, vector<16x32xf32>, vector<2x32xf32> -> vector<2x32xf32>
    %95 = vector.broadcast %89 : vector<1x32xf32> to vector<2x32xf32>
    %96 = arith.addf %94, %95 : vector<2x32xf32>
    %cst_44 = arith.constant 0.000000e+00 : f32
    %97 = vector.broadcast %cst_44 : f32 to vector<2x32xf32>
    %98 = arith.maximumf %96, %97 : vector<2x32xf32>
    %cst_45 = arith.constant dense<0.000000e+00> : vector<2x32xf32>
    %99 = tpu.matmul %98, %90, %cst_45 {dimension_numbers = #tpu.dot_dimension_numbers<[1], [0], [0], [1], [0, 0, 1, 1], [], []>} : vector<2x32xf32>, vector<32x32xf32>, vector<2x32xf32> -> vector<2x32xf32>
    %100 = vector.broadcast %91 : vector<1x32xf32> to vector<2x32xf32>
    %101 = arith.addf %99, %100 : vector<2x32xf32>
    %cst_46 = arith.constant 0.000000e+00 : f32
    %102 = vector.broadcast %cst_46 : f32 to vector<2x32xf32>
    %103 = arith.maximumf %101, %102 : vector<2x32xf32>
    %cst_47 = arith.constant dense<0.000000e+00> : vector<2x24xf32>
    %104 = tpu.matmul %103, %92, %cst_47 {dimension_numbers = #tpu.dot_dimension_numbers<[1], [0], [0], [1], [0, 0, 1, 1], [], []>} : vector<2x32xf32>, vector<32x24xf32>, vector<2x24xf32> -> vector<2x24xf32>
    %105 = vector.broadcast %93 : vector<1x24xf32> to vector<2x24xf32>
    %106 = arith.addf %104, %105 : vector<2x24xf32>
    %107 = vector.extract_strided_slice %106 {offsets = [0, 0], sizes = [2, 16], strides = [1, 1]} : vector<2x24xf32> to vector<2x16xf32>
    %108 = vector.extract_strided_slice %106 {offsets = [0, 16], sizes = [2, 8], strides = [1, 1]} : vector<2x24xf32> to vector<2x8xf32>
    %109 = arith.subf %56, %107 : vector<2x16xf32>
    %110 = arith.mulf %109, %1 : vector<2x16xf32>
    %111 = arith.addf %57, %108 : vector<2x8xf32>
    %c0_48 = arith.constant 0 : index
    %c40 = arith.constant 40 : index
    %112 = vector.load %arg6[%c0_48, %c40] : memref<2x128xf32, #tpu.memory_space<vmem>>, vector<2x8xf32>
    tpu.vector_store %arg6[%c0_48, %c40], %108 {strides = array<i32>} : memref<2x128xf32, #tpu.memory_space<vmem>>, vector<2x8xf32>,
    %c0_49 = arith.constant 0 : index
    %c80 = arith.constant 80 : index
    %113 = vector.load %arg6[%c0_49, %c80] : memref<2x128xf32, #tpu.memory_space<vmem>>, vector<2x16xf32>
    tpu.vector_store %arg6[%c0_49, %c80], %107 {strides = array<i32>} : memref<2x128xf32, #tpu.memory_space<vmem>>, vector<2x16xf32>,
    %c0_50 = arith.constant 0 : index
    %c0_51 = arith.constant 0 : index
    %114 = vector.load %arg6[%c0_50, %c0_51] : memref<2x128xf32, #tpu.memory_space<vmem>>, vector<2x8xf32>
    tpu.vector_store %arg6[%c0_50, %c0_51], %111 {strides = array<i32>} : memref<2x128xf32, #tpu.memory_space<vmem>>, vector<2x8xf32>,
    %c0_52 = arith.constant 0 : index
    %c8 = arith.constant 8 : index
    %115 = vector.load %arg6[%c0_52, %c8] : memref<2x128xf32, #tpu.memory_space<vmem>>, vector<2x16xf32>
    tpu.vector_store %arg6[%c0_52, %c8], %110 {strides = array<i32>} : memref<2x128xf32, #tpu.memory_space<vmem>>, vector<2x16xf32>,
    %cst_53 = arith.constant 0.000000e+00 : f32
    %116 = vector.broadcast %cst_53 : f32 to vector<2x32xf32>
    %c0_54 = arith.constant 0 : index
    %c96 = arith.constant 96 : index
    %117 = vector.load %arg6[%c0_54, %c96] : memref<2x128xf32, #tpu.memory_space<vmem>>, vector<2x32xf32>
    tpu.vector_store %arg6[%c0_54, %c96], %116 {strides = array<i32>} : memref<2x128xf32, #tpu.memory_space<vmem>>, vector<2x32xf32>,
    return
  }
  func.func @transform_0(%arg0: i32) -> (i32, i32) {
    %c0_i32 = arith.constant 0 : i32
    %c0_i32_0 = arith.constant 0 : i32
    return %arg0, %c0_i32 : i32, i32
  }
  func.func @transform_1(%arg0: i32) -> (i32, i32) {
    %c0_i32 = arith.constant 0 : i32
    %c0_i32_0 = arith.constant 0 : i32
    return %arg0, %c0_i32 : i32, i32
  }
  func.func @transform_2(%arg0: i32) -> (i32, i32) {
    %c0_i32 = arith.constant 0 : i32
    %c0_i32_0 = arith.constant 0 : i32
    %c0_i32_1 = arith.constant 0 : i32
    return %c0_i32, %c0_i32_0 : i32, i32
  }
  func.func @transform_3(%arg0: i32) -> (i32, i32) {
    %c0_i32 = arith.constant 0 : i32
    %c0_i32_0 = arith.constant 0 : i32
    %c0_i32_1 = arith.constant 0 : i32
    return %c0_i32, %c0_i32_0 : i32, i32
  }
  func.func @transform_4(%arg0: i32) -> (i32, i32) {
    %c0_i32 = arith.constant 0 : i32
    %c0_i32_0 = arith.constant 0 : i32
    %c0_i32_1 = arith.constant 0 : i32
    return %c0_i32, %c0_i32_0 : i32, i32
  }
  func.func @transform_5(%arg0: i32) -> (i32, i32) {
    %c0_i32 = arith.constant 0 : i32
    %c0_i32_0 = arith.constant 0 : i32
    return %arg0, %c0_i32 : i32, i32
  }
}

</mosaic_0001>

<llo_original>
// kernel: tpu_custom_call.1
$region0: #{tpu_custom_call.1}
  #allocation0 [shape = 'u32[]', space=smem, size = 0x4, offset = 0x4, fixed_abs, tag = 'smem constant byte address 0x4 - core index']
  #allocation1 [shape = 'u32[144,128]{1,0:T(1,128)}', space=vmem, size = 0x12000, scoped, tag = 'internal scratch']
  %s0 = inlined_call_operand.hbm [shape: f32[2,16], index: 0, kind: input, shape index: {}]
  %s1 = inlined_call_operand.vmem [shape: f32[2,16], index: 1, kind: input, shape index: {}]
  %s2 = inlined_call_operand.hbm [shape: f32[16,128], index: 2, kind: input, shape index: {}]
  %s3 = inlined_call_operand.hbm [shape: f32[32,128], index: 3, kind: input, shape index: {}]
  %s4 = inlined_call_operand.vmem [shape: f32[1,256], index: 4, kind: input, shape index: {}]
  %s5 = inlined_call_operand.hbm [shape: f32[2,128], index: 5, kind: output, shape index: {}]
  %s6 = sld [smem:[#allocation0]]
  $region42: #{tpu_custom_call.1} parent=0
    _
  %s8 = ssub.s32 1, %s6
  %s9 = scalar_select 0, %s8, %s6
  $region1: #{tpu_custom_call.1} parent=0
    #allocation2 [shape = 'u8[1024]{0}', space=vmem, size = 0x400, scoped, tag = 'input window, operand 0, single buffered']
    #allocation3 [shape = 's32[1]{0}', space=sflag, size = 0x4, scoped, tag = 'scoped memory for tpu_custom_call.1']
    #allocation4 [shape = 's32[1]{0}', space=sflag, size = 0x4, scoped, tag = 'scoped memory for tpu_custom_call.1']
    #allocation5 [shape = 'u8[8192]{0}', space=vmem, size = 0x2000, scoped, tag = 'input window, operand 2, single buffered']
    #allocation6 [shape = 's32[1]{0}', space=sflag, size = 0x4, scoped, tag = 'scoped memory for tpu_custom_call.1']
    #allocation7 [shape = 'u8[16384]{0}', space=vmem, size = 0x4000, scoped, tag = 'input window, operand 3, single buffered']
    #allocation8 [shape = 'u8[1024]{0}', space=vmem, size = 0x400, scoped, tag = 'output window, operand 0, single buffered']
    %10 = vsyncpa [#allocation3], 0
    %11 = vsyncpa [#allocation6], 0
    %12 = vsyncpa [#allocation4], 0
    // Predicated region
    $region2: #{tpu_custom_call.1} parent=1 // pred_check
      _
    $region3: #{tpu_custom_call.1} parent=1 // pred_check_branch
      %14 = sbr.rel (0) target = $region5
    $region4: #{tpu_custom_call.1} parent=1 // pred_region
      %s16 = ssub.s32 32, 32
      %17 = vsyncadd [#allocation3], %s16
      %s19 = sshll.u32 [#allocation2], 4
      %s20 = int_to_ptr.vmem [resolvable:$true] %s19
      %22 = dma.hbm_to_vmem [thread:$0]  %s0, 32, %s20, [#allocation3]
    $region5: #{tpu_custom_call.1} parent=1 // pred_fallthru
      _
    // Predicated region
    $region6: #{tpu_custom_call.1} parent=1 // pred_check
      _
    $region7: #{tpu_custom_call.1} parent=1 // pred_check_branch
      %24 = sbr.rel (0) target = $region9
    $region8: #{tpu_custom_call.1} parent=1 // pred_region
      _
    $region9: #{tpu_custom_call.1} parent=1 // pred_fallthru
      _
    // Predicated region
    $region10: #{tpu_custom_call.1} parent=1 // pred_check
      _
    $region11: #{tpu_custom_call.1} parent=1 // pred_check_branch
      %26 = sbr.rel (0) target = $region13
    $region12: #{tpu_custom_call.1} parent=1 // pred_region
      %s28 = ssub.s32 256, 256
      %29 = vsyncadd [#allocation6], %s28
      %s30 = sshll.u32 [#allocation5], 4
      %s31 = int_to_ptr.vmem [resolvable:$true] %s30
      %36 = dma.hbm_to_vmem [thread:$0]  %s2, 256, %s31, [#allocation6], 128, 128, 8
    $region13: #{tpu_custom_call.1} parent=1 // pred_fallthru
      _
    // Predicated region
    $region14: #{tpu_custom_call.1} parent=1 // pred_check
      _
    $region15: #{tpu_custom_call.1} parent=1 // pred_check_branch
      %38 = sbr.rel (0) target = $region17
    $region16: #{tpu_custom_call.1} parent=1 // pred_region
      %s40 = ssub.s32 512, 512
      %41 = vsyncadd [#allocation6], %s40
      %s42 = sshll.u32 [#allocation7], 4
      %s43 = int_to_ptr.vmem [resolvable:$true] %s42
      %48 = dma.hbm_to_vmem [thread:$0]  %s3, 512, %s43, [#allocation6], 128, 128, 8
    $region17: #{tpu_custom_call.1} parent=1 // pred_fallthru
      _
    // Predicated region
    $region18: #{tpu_custom_call.1} parent=1 // pred_check
      _
    $region19: #{tpu_custom_call.1} parent=1 // pred_check_branch
      %50 = sbr.rel (0) target = $region21
    $region20: #{tpu_custom_call.1} parent=1 // pred_region
      _
    $region21: #{tpu_custom_call.1} parent=1 // pred_fallthru
      _
    // Predicated region
    $region22: #{tpu_custom_call.1} parent=1 // pred_check
      _
    $region23: #{tpu_custom_call.1} parent=1 // pred_check_branch
      %52 = sbr.rel (0) target = $region25
    $region24: #{tpu_custom_call.1} parent=1 // pred_region
      %53 = dma.done [#allocation3], 32
    $region25: #{tpu_custom_call.1} parent=1 // pred_fallthru
      _
    // Predicated region
    $region26: #{tpu_custom_call.1} parent=1 // pred_check
      _
    $region27: #{tpu_custom_call.1} parent=1 // pred_check_branch
      %55 = sbr.rel (0) target = $region29
    $region28: #{tpu_custom_call.1} parent=1 // pred_region
      %56 = dma.done [#allocation6], 256
    $region29: #{tpu_custom_call.1} parent=1 // pred_fallthru
      _
    // Predicated region
    $region30: #{tpu_custom_call.1} parent=1 // pred_check
      _
    $region31: #{tpu_custom_call.1} parent=1 // pred_check_branch
      %58 = sbr.rel (0) target = $region33
    $region32: #{tpu_custom_call.1} parent=1 // pred_region
      %59 = dma.done [#allocation6], 512
    $region33: #{tpu_custom_call.1} parent=1 // pred_fallthru
      _
    %v60 = vld [vmem:[#allocation2] sm:$0x3]
    %v61 = vld [vmem:[%s1] sm:$0x3]
    %63 = vset.pattern.permute.xlu0 15
    %64 = vperm.xlu0 %63, %v60
    %v65 = vpop.permute.xlu0 %64
    %vm67 = vcmask 255168
    %68 = vst.msk [vmem:[#allocation8] sm:$0x3] %vm67, %v65
    %vm69 = vcmask 517504
    %70 = vst.msk [vmem:[#allocation8] sm:$0x3] %vm69, %v65
    %v71 = vlaneseq
    %v72 = vand.u32 %v71, 127
    %73 = vrot.lane.b32.xlu0 %v60, 127
    %v74 = vpop.permute.xlu0 %73
    %76 = vrot.lane.b32.xlu0 %v60, 15
    %v77 = vpop.permute.xlu0 %76
    %vm79 = vcmask 121856
    %v80 = vsel %vm79, %v74, %v77
    %v81 = vmax.f32 %v60, %v80
    %vm82 = vcmp.lt.s32.totalorder %v72, 0
    %v83 = vsub.s32 0, %v72
    %v84 = vsel %vm82, %v83, %v72
    %v85 = vshrl.u32 %v84, 1
    %v86 = vand.u32 %v84, 1
    %v87 = vsub.s32 0, %v86
    %v88 = vsel %vm82, %v87, %v86
    %vm89 = vcmp.ne.s32.totalorder %v88, 0
    %vm90 = vcmp.lt.s32.totalorder %v88, 0
    %vm91 = vmand %vm90, %vm89
    %v92 = vadd.s32 %v88, 2
    %v93 = vsel %vm91, %v92, %v88
    %vm94 = vcmp.eq.s32.totalorder %v93, 0
    %v95 = vsel %vm94, %v81, 0.0
    %v96 = vld [vmem:[#allocation5] sm:$0xff]
    %v97 = vld [vmem:[#allocation5 + $0x8] sm:$0xff]
    %v98 = vld [vmem:[%s4] sm:$0x1]
    %v99 = vld [vmem:[#allocation7] sm:$0xff]
    %v100 = vld [vmem:[#allocation7 + $0x8] sm:$0xff]
    %v101 = vld [vmem:[#allocation7 + $0x10] sm:$0xff]
    %v102 = vld [vmem:[#allocation7 + $0x18] sm:$0xff]
    %v104 = vlaneseq
    %v105 = vshrl.u32 %v104, 7
    %v106 = vsub.s32 0, %v105
    %v107 = vrot.slane %v98, %v106
    %vm109 = vcmask 130048
    %v111 = vsel %vm109, %v95, 0
    %113 = vmatprep.subr.mxu0 0.0
    %114 = vmatpush1.msra.mxu0 %v96
    %115 = vmatprep.subr.mxu0 0.0
    %116 = vmatpush1.msra.mxu0 %v97
    %117 = vmatprep.subr.mxu0 0.0
    %118 = vmatpush1.msra.mxu0 0.0
    %119 = vmatprep.subr.mxu0 0.0
    %120 = vmatpush1.msra.mxu0 0.0
    %121 = vmatprep.subr.mxu0 0.0
    %122 = vmatpush1.msra.mxu0 0.0
    %123 = vmatprep.subr.mxu0 0.0
    %124 = vmatpush1.msra.mxu0 0.0
    %125 = vmatprep.subr.mxu0 0.0
    %126 = vmatpush1.msra.mxu0 0.0
    %127 = vmatprep.subr.mxu0 0.0
    %128 = vmatpush1.msra.mxu0 0.0
    %129 = vmatprep.subr.mxu0 0.0
    %130 = vmatpush1.msra.mxu0 0.0
    %131 = vmatprep.subr.mxu0 0.0
    %132 = vmatpush1.msra.mxu0 0.0
    %133 = vmatprep.subr.mxu0 0.0
    %134 = vmatpush1.msra.mxu0 0.0
    %135 = vmatprep.subr.mxu0 0.0
    %136 = vmatpush1.msra.mxu0 0.0
    %137 = vmatprep.subr.mxu0 0.0
    %138 = vmatpush1.msra.mxu0 0.0
    %139 = vmatprep.subr.mxu0 0.0
    %140 = vmatpush1.msra.mxu0 0.0
    %141 = vmatprep.subr.mxu0 0.0
    %142 = vmatpush1.msra.mxu0 0.0
    %143 = vmatprep.subr.mxu0 0.0
    %144 = vmatpush1.msra.mxu0 0.0
    %145 = vmatprep.subr.mxu0 0.0
    %146 = vmatpush1.msra.mxu0 0.0
    %147 = vmatprep.subr.mxu0 0.0
    %148 = vmatpush1.msra.mxu0 0.0
    %149 = vmatprep.subr.mxu0 0.0
    %150 = vmatpush1.msra.mxu0 0.0
    %151 = vmatprep.subr.mxu0 0.0
    %152 = vmatpush1.msra.mxu0 0.0
    %153 = vmatprep.subr.mxu0 0.0
    %154 = vmatpush1.msra.mxu0 0.0
    %155 = vmatprep.subr.mxu0 0.0
    %156 = vmatpush1.msra.mxu0 0.0
    %157 = vmatprep.subr.mxu0 0.0
    %158 = vmatpush1.msra.mxu0 0.0
    %159 = vmatprep.subr.mxu0 0.0
    %160 = vmatpush1.msra.mxu0 0.0
    %161 = vmatprep.subr.mxu0 0.0
    %162 = vmatpush1.msra.mxu0 0.0
    %163 = vmatprep.subr.mxu0 0.0
    %164 = vmatpush1.msra.mxu0 0.0
    %165 = vmatprep.subr.mxu0 0.0
    %166 = vmatpush1.msra.mxu0 0.0
    %167 = vmatprep.subr.mxu0 0.0
    %168 = vmatpush1.msra.mxu0 0.0
    %169 = vmatprep.subr.mxu0 0.0
    %170 = vmatpush1.msra.mxu0 0.0
    %171 = vmatprep.subr.mxu0 0.0
    %172 = vmatpush1.msra.mxu0 0.0
    %173 = vmatprep.subr.mxu0 0.0
    %174 = vmatpush1.msra.mxu0 0.0
    %175 = vmatprep.subr.mxu0 0.0
    %176 = vmatpush1.msra.mxu0 0.0
    %177 = vmatprep.mubr.f32.mxu0 0.0
    %178 = vmatmul.mubr.f32.gmra.mrb[0].mxu0 %v111
    %v179 = vpop.f32.mrb[0].mxu0
    %v180 = vadd.f32 %v107, %v179
    %v181 = vpop.f32.mrb[0].mxu0
    %182 = vdwg.mxu0
    %v183 = vmax.f32 %v180, 0.0
    %184 = vrot.lane.b32.xlu0 %v107, 96
    %v185 = vpop.permute.xlu0 %184
    %vm187 = vcmask 261120
    %v189 = vsel %vm187, %v183, 0
    %191 = vmatprep.subr.mxu0 0.0
    %192 = vmatpush1.msra.mxu0 %v99
    %193 = vmatprep.subr.mxu0 0.0
    %194 = vmatpush1.msra.mxu0 %v100
    %195 = vmatprep.subr.mxu0 0.0
    %196 = vmatpush1.msra.mxu0 %v101
    %197 = vmatprep.subr.mxu0 0.0
    %198 = vmatpush1.msra.mxu0 %v102
    %199 = vmatprep.subr.mxu0 0.0
    %200 = vmatpush1.msra.mxu0 0.0
    %201 = vmatprep.subr.mxu0 0.0
    %202 = vmatpush1.msra.mxu0 0.0
    %203 = vmatprep.subr.mxu0 0.0
    %204 = vmatpush1.msra.mxu0 0.0
    %205 = vmatprep.subr.mxu0 0.0
    %206 = vmatpush1.msra.mxu0 0.0
    %207 = vmatprep.subr.mxu0 0.0
    %208 = vmatpush1.msra.mxu0 0.0
    %209 = vmatprep.subr.mxu0 0.0
    %210 = vmatpush1.msra.mxu0 0.0
    %211 = vmatprep.subr.mxu0 0.0
    %212 = vmatpush1.msra.mxu0 0.0
    %213 = vmatprep.subr.mxu0 0.0
    %214 = vmatpush1.msra.mxu0 0.0
    %215 = vmatprep.subr.mxu0 0.0
    %216 = vmatpush1.msra.mxu0 0.0
    %217 = vmatprep.subr.mxu0 0.0
    %218 = vmatpush1.msra.mxu0 0.0
    %219 = vmatprep.subr.mxu0 0.0
    %220 = vmatpush1.msra.mxu0 0.0
    %221 = vmatprep.subr.mxu0 0.0
    %222 = vmatpush1.msra.mxu0 0.0
    %223 = vmatprep.subr.mxu0 0.0
    %224 = vmatpush1.msra.mxu0 0.0
    %225 = vmatprep.subr.mxu0 0.0
    %226 = vmatpush1.msra.mxu0 0.0
    %227 = vmatprep.subr.mxu0 0.0
    %228 = vmatpush1.msra.mxu0 0.0
    %229 = vmatprep.subr.mxu0 0.0
    %230 = vmatpush1.msra.mxu0 0.0
    %231 = vmatprep.subr.mxu0 0.0
    %232 = vmatpush1.msra.mxu0 0.0
    %233 = vmatprep.subr.mxu0 0.0
    %234 = vmatpush1.msra.mxu0 0.0
    %235 = vmatprep.subr.mxu0 0.0
    %236 = vmatpush1.msra.mxu0 0.0
    %237 = vmatprep.subr.mxu0 0.0
    %238 = vmatpush1.msra.mxu0 0.0
    %239 = vmatprep.subr.mxu0 0.0
    %240 = vmatpush1.msra.mxu0 0.0
    %241 = vmatprep.subr.mxu0 0.0
    %242 = vmatpush1.msra.mxu0 0.0
    %243 = vmatprep.subr.mxu0 0.0
    %244 = vmatpush1.msra.mxu0 0.0
    %245 = vmatprep.subr.mxu0 0.0
    %246 = vmatpush1.msra.mxu0 0.0
    %247 = vmatprep.subr.mxu0 0.0
    %248 = vmatpush1.msra.mxu0 0.0
    %249 = vmatprep.subr.mxu0 0.0
    %250 = vmatpush1.msra.mxu0 0.0
    %251 = vmatprep.subr.mxu0 0.0
    %252 = vmatpush1.msra.mxu0 0.0
    %253 = vmatprep.subr.mxu0 0.0
    %254 = vmatpush1.msra.mxu0 0.0
    %255 = vmatprep.mubr.f32.mxu0 0.0
    %256 = vmatmul.mubr.f32.gmra.mrb[0].mxu0 %v189
    %v257 = vpop.f32.mrb[0].mxu0
    %v258 = vadd.f32 %v185, %v257
    %v259 = vpop.f32.mrb[0].mxu0
    %260 = vdwg.mxu0
    %v261 = vmax.f32 %v258, 0.0
    %266 = vrot.lane.b32.xlu0 %v99, 96
    %v267 = vpop.permute.xlu0 %266
    %268 = vrot.lane.b32.xlu0 %v100, 96
    %v269 = vpop.permute.xlu0 %268
    %270 = vrot.lane.b32.xlu0 %v101, 96
    %v271 = vpop.permute.xlu0 %270
    %272 = vrot.lane.b32.xlu0 %v102, 96
    %v273 = vpop.permute.xlu0 %272
    %278 = vrot.lane.b32.xlu0 %v107, 64
    %v279 = vpop.permute.xlu0 %278
    %v282 = vsel %vm187, %v261, 0
    %284 = vmatprep.subr.mxu0 0.0
    %285 = vmatpush1.msra.mxu0 %v267
    %286 = vmatprep.subr.mxu0 0.0
    %287 = vmatpush1.msra.mxu0 %v269
    %288 = vmatprep.subr.mxu0 0.0
    %289 = vmatpush1.msra.mxu0 %v271
    %290 = vmatprep.subr.mxu0 0.0
    %291 = vmatpush1.msra.mxu0 %v273
    %292 = vmatprep.subr.mxu0 0.0
    %293 = vmatpush1.msra.mxu0 0.0
    %294 = vmatprep.subr.mxu0 0.0
    %295 = vmatpush1.msra.mxu0 0.0
    %296 = vmatprep.subr.mxu0 0.0
    %297 = vmatpush1.msra.mxu0 0.0
    %298 = vmatprep.subr.mxu0 0.0
    %299 = vmatpush1.msra.mxu0 0.0
    %300 = vmatprep.subr.mxu0 0.0
    %301 = vmatpush1.msra.mxu0 0.0
    %302 = vmatprep.subr.mxu0 0.0
    %303 = vmatpush1.msra.mxu0 0.0
    %304 = vmatprep.subr.mxu0 0.0
    %305 = vmatpush1.msra.mxu0 0.0
    %306 = vmatprep.subr.mxu0 0.0
    %307 = vmatpush1.msra.mxu0 0.0
    %308 = vmatprep.subr.mxu0 0.0
    %309 = vmatpush1.msra.mxu0 0.0
    %310 = vmatprep.subr.mxu0 0.0
    %311 = vmatpush1.msra.mxu0 0.0
    %312 = vmatprep.subr.mxu0 0.0
    %313 = vmatpush1.msra.mxu0 0.0
    %314 = vmatprep.subr.mxu0 0.0
    %315 = vmatpush1.msra.mxu0 0.0
    %316 = vmatprep.subr.mxu0 0.0
    %317 = vmatpush1.msra.mxu0 0.0
    %318 = vmatprep.subr.mxu0 0.0
    %319 = vmatpush1.msra.mxu0 0.0
    %320 = vmatprep.subr.mxu0 0.0
    %321 = vmatpush1.msra.mxu0 0.0
    %322 = vmatprep.subr.mxu0 0.0
    %323 = vmatpush1.msra.mxu0 0.0
    %324 = vmatprep.subr.mxu0 0.0
    %325 = vmatpush1.msra.mxu0 0.0
    %326 = vmatprep.subr.mxu0 0.0
    %327 = vmatpush1.msra.mxu0 0.0
    %328 = vmatprep.subr.mxu0 0.0
    %329 = vmatpush1.msra.mxu0 0.0
    %330 = vmatprep.subr.mxu0 0.0
    %331 = vmatpush1.msra.mxu0 0.0
    %332 = vmatprep.subr.mxu0 0.0
    %333 = vmatpush1.msra.mxu0 0.0
    %334 = vmatprep.subr.mxu0 0.0
    %335 = vmatpush1.msra.mxu0 0.0
    %336 = vmatprep.subr.mxu0 0.0
    %337 = vmatpush1.msra.mxu0 0.0
    %338 = vmatprep.subr.mxu0 0.0
    %339 = vmatpush1.msra.mxu0 0.0
    %340 = vmatprep.subr.mxu0 0.0
    %341 = vmatpush1.msra.mxu0 0.0
    %342 = vmatprep.subr.mxu0 0.0
    %343 = vmatpush1.msra.mxu0 0.0
    %344 = vmatprep.subr.mxu0 0.0
    %345 = vmatpush1.msra.mxu0 0.0
    %346 = vmatprep.subr.mxu0 0.0
    %347 = vmatpush1.msra.mxu0 0.0
    %348 = vmatprep.mubr.f32.mxu0 0.0
    %349 = vmatmul.mubr.f32.gmra.mrb[0].mxu0 %v282
    %v350 = vpop.f32.mrb[0].mxu0
    %v351 = vadd.f32 %v279, %v350
    %v352 = vpop.f32.mrb[0].mxu0
    %353 = vdwg.mxu0
    %v354 = vsub.f32 %v60, %v351
    %v355 = vmul.f32 %v354, %v61
    %v356 = vadd.f32 %v65, %v351
    %358 = vrot.lane.b32.xlu0 %v351, 16
    %v359 = vpop.permute.xlu0 %358
    %vm361 = vcmask 320768
    %362 = vst.msk [vmem:[#allocation8] sm:$0x3] %vm361, %v359
    %363 = vrot.lane.b32.xlu0 %v351, 64
    %v364 = vpop.permute.xlu0 %363
    %vm366 = vcmask 648704
    %367 = vst.msk [vmem:[#allocation8] sm:$0x3] %vm366, %v364
    %369 = vrot.lane.b32.xlu0 %v355, 127
    %v370 = vpop.permute.xlu0 %369
    %372 = vrot.lane.b32.xlu0 %v355, 15
    %v373 = vpop.permute.xlu0 %372
    %v375 = vsel %vm79, %v370, %v373
    %v376 = vmax.f32 %v355, %v375
    %378 = vrot.lane.b32.xlu0 %v376, 126
    %v379 = vpop.permute.xlu0 %378
    %381 = vrot.lane.b32.xlu0 %v376, 14
    %v382 = vpop.permute.xlu0 %381
    %vm384 = vcmask 113664
    %v385 = vsel %vm384, %v379, %v382
    %v386 = vmax.f32 %v376, %v385
    %vm387 = vcmp.lt.s32.totalorder %v72, 0
    %v388 = vsub.s32 0, %v72
    %v389 = vsel %vm387, %v388, %v72
    %v390 = vshrl.u32 %v389, 2
    %v391 = vand.u32 %v389, 3
    %v392 = vsub.s32 0, %v391
    %v393 = vsel %vm387, %v392, %v391
    %vm394 = vcmp.ne.s32.totalorder %v393, 0
    %vm395 = vcmp.lt.s32.totalorder %v393, 0
    %vm396 = vmand %vm395, %vm394
    %v397 = vadd.s32 %v393, 4
    %v398 = vsel %vm396, %v397, %v393
    %vm399 = vcmp.eq.s32.totalorder %v398, 0
    %v400 = vsel %vm399, %v386, 0.0
    %v401 = vld [vmem:[#allocation5] sm:$0xff]
    %v402 = vld [vmem:[#allocation5 + $0x8] sm:$0xff]
    %v403 = vld [vmem:[%s4] sm:$0x1]
    %v404 = vld [vmem:[#allocation7] sm:$0xff]
    %v405 = vld [vmem:[#allocation7 + $0x8] sm:$0xff]
    %v406 = vld [vmem:[#allocation7 + $0x10] sm:$0xff]
    %v407 = vld [vmem:[#allocation7 + $0x18] sm:$0xff]
    %v408 = vld [vmem:[%s4] sm:$0x3]
    %v409 = vld [vmem:[%s4 + $0x1] sm:$0x1]
    %v411 = vlaneseq
    %v412 = vshrl.u32 %v411, 7
    %v413 = vsub.s32 0, %v412
    %v414 = vrot.slane %v403, %v413
    %417 = vrot.lane.b32.xlu0 %v401, 96
    %v418 = vpop.permute.xlu0 %417
    %419 = vrot.lane.b32.xlu0 %v402, 96
    %v420 = vpop.permute.xlu0 %419
    %423 = vrot.lane.b32.xlu0 %v414, 40
    %v424 = vpop.permute.xlu0 %423
    %v427 = vsel %vm109, %v400, 0
    %429 = vmatprep.subr.mxu0 0.0
    %430 = vmatpush1.msra.mxu0 %v418
    %431 = vmatprep.subr.mxu0 0.0
    %432 = vmatpush1.msra.mxu0 %v420
    %433 = vmatprep.subr.mxu0 0.0
    %434 = vmatpush1.msra.mxu0 0.0
    %435 = vmatprep.subr.mxu0 0.0
    %436 = vmatpush1.msra.mxu0 0.0
    %437 = vmatprep.subr.mxu0 0.0
    %438 = vmatpush1.msra.mxu0 0.0
    %439 = vmatprep.subr.mxu0 0.0
    %440 = vmatpush1.msra.mxu0 0.0
    %441 = vmatprep.subr.mxu0 0.0
    %442 = vmatpush1.msra.mxu0 0.0
    %443 = vmatprep.subr.mxu0 0.0
    %444 = vmatpush1.msra.mxu0 0.0
    %445 = vmatprep.subr.mxu0 0.0
    %446 = vmatpush1.msra.mxu0 0.0
    %447 = vmatprep.subr.mxu0 0.0
    %448 = vmatpush1.msra.mxu0 0.0
    %449 = vmatprep.subr.mxu0 0.0
    %450 = vmatpush1.msra.mxu0 0.0
    %451 = vmatprep.subr.mxu0 0.0
    %452 = vmatpush1.msra.mxu0 0.0
    %453 = vmatprep.subr.mxu0 0.0
    %454 = vmatpush1.msra.mxu0 0.0
    %455 = vmatprep.subr.mxu0 0.0
    %456 = vmatpush1.msra.mxu0 0.0
    %457 = vmatprep.subr.mxu0 0.0
    %458 = vmatpush1.msra.mxu0 0.0
    %459 = vmatprep.subr.mxu0 0.0
    %460 = vmatpush1.msra.mxu0 0.0
    %461 = vmatprep.subr.mxu0 0.0
    %462 = vmatpush1.msra.mxu0 0.0
    %463 = vmatprep.subr.mxu0 0.0
    %464 = vmatpush1.msra.mxu0 0.0
    %465 = vmatprep.subr.mxu0 0.0
    %466 = vmatpush1.msra.mxu0 0.0
    %467 = vmatprep.subr.mxu0 0.0
    %468 = vmatpush1.msra.mxu0 0.0
    %469 = vmatprep.subr.mxu0 0.0
    %470 = vmatpush1.msra.mxu0 0.0
    %471 = vmatprep.subr.mxu0 0.0
    %472 = vmatpush1.msra.mxu0 0.0
    %473 = vmatprep.subr.mxu0 0.0
    %474 = vmatpush1.msra.mxu0 0.0
    %475 = vmatprep.subr.mxu0 0.0
    %476 = vmatpush1.msra.mxu0 0.0
    %477 = vmatprep.subr.mxu0 0.0
    %478 = vmatpush1.msra.mxu0 0.0
    %479 = vmatprep.subr.mxu0 0.0
    %480 = vmatpush1.msra.mxu0 0.0
    %481 = vmatprep.subr.mxu0 0.0
    %482 = vmatpush1.msra.mxu0 0.0
    %483 = vmatprep.subr.mxu0 0.0
    %484 = vmatpush1.msra.mxu0 0.0
    %485 = vmatprep.subr.mxu0 0.0
    %486 = vmatpush1.msra.mxu0 0.0
    %487 = vmatprep.subr.mxu0 0.0
    %488 = vmatpush1.msra.mxu0 0.0
    %489 = vmatprep.subr.mxu0 0.0
    %490 = vmatpush1.msra.mxu0 0.0
    %491 = vmatprep.subr.mxu0 0.0
    %492 = vmatpush1.msra.mxu0 0.0
    %493 = vmatprep.mubr.f32.mxu0 0.0
    %494 = vmatmul.mubr.f32.gmra.mrb[0].mxu0 %v427
    %v495 = vpop.f32.mrb[0].mxu0
    %v496 = vadd.f32 %v424, %v495
    %v497 = vpop.f32.mrb[0].mxu0
    %498 = vdwg.mxu0
    %v499 = vmax.f32 %v496, 0.0
    %v501 = vlaneseq
    %v502 = vshrl.u32 %v501, 7
    %v503 = vsub.s32 0, %v502
    %v504 = vrot.slane %v408, %v503
    %v505 = vlaneseq
    %v506 = vshrl.u32 %v505, 7
    %v507 = vsub.s32 1, %v506
    %v508 = vrot.slane %v408, %v507
    %513 = vrot.lane.b32.xlu0 %v404, 72
    %v514 = vpop.permute.xlu0 %513
    %515 = vrot.lane.b32.xlu0 %v405, 72
    %v516 = vpop.permute.xlu0 %515
    %517 = vrot.lane.b32.xlu0 %v406, 72
    %v518 = vpop.permute.xlu0 %517
    %519 = vrot.lane.b32.xlu0 %v407, 72
    %v520 = vpop.permute.xlu0 %519
    %525 = vrot.lane.b32.xlu0 %v504, 8
    %v526 = vpop.permute.xlu0 %525
    %527 = vrot.lane.b32.xlu0 %v508, 8
    %v528 = vpop.permute.xlu0 %527
    %vm529 = vcmask 64512
    %v530 = vsel %vm529, %v526, %v528
    %v533 = vsel %vm187, %v499, 0
    %535 = vmatprep.subr.mxu0 0.0
    %536 = vmatpush1.msra.mxu0 %v514
    %537 = vmatprep.subr.mxu0 0.0
    %538 = vmatpush1.msra.mxu0 %v516
    %539 = vmatprep.subr.mxu0 0.0
    %540 = vmatpush1.msra.mxu0 %v518
    %541 = vmatprep.subr.mxu0 0.0
    %542 = vmatpush1.msra.mxu0 %v520
    %543 = vmatprep.subr.mxu0 0.0
    %544 = vmatpush1.msra.mxu0 0.0
    %545 = vmatprep.subr.mxu0 0.0
    %546 = vmatpush1.msra.mxu0 0.0
    %547 = vmatprep.subr.mxu0 0.0
    %548 = vmatpush1.msra.mxu0 0.0
    %549 = vmatprep.subr.mxu0 0.0
    %550 = vmatpush1.msra.mxu0 0.0
    %551 = vmatprep.subr.mxu0 0.0
    %552 = vmatpush1.msra.mxu0 0.0
    %553 = vmatprep.subr.mxu0 0.0
    %554 = vmatpush1.msra.mxu0 0.0
    %555 = vmatprep.subr.mxu0 0.0
    %556 = vmatpush1.msra.mxu0 0.0
    %557 = vmatprep.subr.mxu0 0.0
    %558 = vmatpush1.msra.mxu0 0.0
    %559 = vmatprep.subr.mxu0 0.0
    %560 = vmatpush1.msra.mxu0 0.0
    %561 = vmatprep.subr.mxu0 0.0
    %562 = vmatpush1.msra.mxu0 0.0
    %563 = vmatprep.subr.mxu0 0.0
    %564 = vmatpush1.msra.mxu0 0.0
    %565 = vmatprep.subr.mxu0 0.0
    %566 = vmatpush1.msra.mxu0 0.0
    %567 = vmatprep.subr.mxu0 0.0
    %568 = vmatpush1.msra.mxu0 0.0
    %569 = vmatprep.subr.mxu0 0.0
    %570 = vmatpush1.msra.mxu0 0.0
    %571 = vmatprep.subr.mxu0 0.0
    %572 = vmatpush1.msra.mxu0 0.0
    %573 = vmatprep.subr.mxu0 0.0
    %574 = vmatpush1.msra.mxu0 0.0
    %575 = vmatprep.subr.mxu0 0.0
    %576 = vmatpush1.msra.mxu0 0.0
    %577 = vmatprep.subr.mxu0 0.0
    %578 = vmatpush1.msra.mxu0 0.0
    %579 = vmatprep.subr.mxu0 0.0
    %580 = vmatpush1.msra.mxu0 0.0
    %581 = vmatprep.subr.mxu0 0.0
    %582 = vmatpush1.msra.mxu0 0.0
    %583 = vmatprep.subr.mxu0 0.0
    %584 = vmatpush1.msra.mxu0 0.0
    %585 = vmatprep.subr.mxu0 0.0
    %586 = vmatpush1.msra.mxu0 0.0
    %587 = vmatprep.subr.mxu0 0.0
    %588 = vmatpush1.msra.mxu0 0.0
    %589 = vmatprep.subr.mxu0 0.0
    %590 = vmatpush1.msra.mxu0 0.0
    %591 = vmatprep.subr.mxu0 0.0
    %592 = vmatpush1.msra.mxu0 0.0
    %593 = vmatprep.subr.mxu0 0.0
    %594 = vmatpush1.msra.mxu0 0.0
    %595 = vmatprep.subr.mxu0 0.0
    %596 = vmatpush1.msra.mxu0 0.0
    %597 = vmatprep.subr.mxu0 0.0
    %598 = vmatpush1.msra.mxu0 0.0
    %599 = vmatprep.mubr.f32.mxu0 0.0
    %600 = vmatmul.mubr.f32.gmra.mrb[0].mxu0 %v533
    %v601 = vpop.f32.mrb[0].mxu0
    %v602 = vadd.f32 %v530, %v601
    %v603 = vpop.f32.mrb[0].mxu0
    %604 = vdwg.mxu0
    %v605 = vmax.f32 %v602, 0.0
    %v607 = vlaneseq
    %v608 = vshrl.u32 %v607, 7
    %v609 = vsub.s32 0, %v608
    %v610 = vrot.slane %v409, %v609
    %611 = vrot.lane.b32.xlu0 %v404, 40
    %v612 = vpop.permute.xlu0 %611
    %613 = vrot.lane.b32.xlu0 %v405, 40
    %v614 = vpop.permute.xlu0 %613
    %615 = vrot.lane.b32.xlu0 %v406, 40
    %v616 = vpop.permute.xlu0 %615
    %617 = vrot.lane.b32.xlu0 %v407, 40
    %v618 = vpop.permute.xlu0 %617
    %623 = vrot.lane.b32.xlu0 %v610, 104
    %v624 = vpop.permute.xlu0 %623
    %v627 = vsel %vm187, %v605, 0
    %629 = vmatprep.subr.mxu0 0.0
    %630 = vmatpush1.msra.mxu0 %v612
    %631 = vmatprep.subr.mxu0 0.0
    %632 = vmatpush1.msra.mxu0 %v614
    %633 = vmatprep.subr.mxu0 0.0
    %634 = vmatpush1.msra.mxu0 %v616
    %635 = vmatprep.subr.mxu0 0.0
    %636 = vmatpush1.msra.mxu0 %v618
    %637 = vmatprep.subr.mxu0 0.0
    %638 = vmatpush1.msra.mxu0 0.0
    %639 = vmatprep.subr.mxu0 0.0
    %640 = vmatpush1.msra.mxu0 0.0
    %641 = vmatprep.subr.mxu0 0.0
    %642 = vmatpush1.msra.mxu0 0.0
    %643 = vmatprep.subr.mxu0 0.0
    %644 = vmatpush1.msra.mxu0 0.0
    %645 = vmatprep.subr.mxu0 0.0
    %646 = vmatpush1.msra.mxu0 0.0
    %647 = vmatprep.subr.mxu0 0.0
    %648 = vmatpush1.msra.mxu0 0.0
    %649 = vmatprep.subr.mxu0 0.0
    %650 = vmatpush1.msra.mxu0 0.0
    %651 = vmatprep.subr.mxu0 0.0
    %652 = vmatpush1.msra.mxu0 0.0
    %653 = vmatprep.subr.mxu0 0.0
    %654 = vmatpush1.msra.mxu0 0.0
    %655 = vmatprep.subr.mxu0 0.0
    %656 = vmatpush1.msra.mxu0 0.0
    %657 = vmatprep.subr.mxu0 0.0
    %658 = vmatpush1.msra.mxu0 0.0
    %659 = vmatprep.subr.mxu0 0.0
    %660 = vmatpush1.msra.mxu0 0.0
    %661 = vmatprep.subr.mxu0 0.0
    %662 = vmatpush1.msra.mxu0 0.0
    %663 = vmatprep.subr.mxu0 0.0
    %664 = vmatpush1.msra.mxu0 0.0
    %665 = vmatprep.subr.mxu0 0.0
    %666 = vmatpush1.msra.mxu0 0.0
    %667 = vmatprep.subr.mxu0 0.0
    %668 = vmatpush1.msra.mxu0 0.0
    %669 = vmatprep.subr.mxu0 0.0
    %670 = vmatpush1.msra.mxu0 0.0
    %671 = vmatprep.subr.mxu0 0.0
    %672 = vmatpush1.msra.mxu0 0.0
    %673 = vmatprep.subr.mxu0 0.0
    %674 = vmatpush1.msra.mxu0 0.0
    %675 = vmatprep.subr.mxu0 0.0
    %676 = vmatpush1.msra.mxu0 0.0
    %677 = vmatprep.subr.mxu0 0.0
    %678 = vmatpush1.msra.mxu0 0.0
    %679 = vmatprep.subr.mxu0 0.0
    %680 = vmatpush1.msra.mxu0 0.0
    %681 = vmatprep.subr.mxu0 0.0
    %682 = vmatpush1.msra.mxu0 0.0
    %683 = vmatprep.subr.mxu0 0.0
    %684 = vmatpush1.msra.mxu0 0.0
    %685 = vmatprep.subr.mxu0 0.0
    %686 = vmatpush1.msra.mxu0 0.0
    %687 = vmatprep.subr.mxu0 0.0
    %688 = vmatpush1.msra.mxu0 0.0
    %689 = vmatprep.subr.mxu0 0.0
    %690 = vmatpush1.msra.mxu0 0.0
    %691 = vmatprep.subr.mxu0 0.0
    %692 = vmatpush1.msra.mxu0 0.0
    %693 = vmatprep.mubr.f32.mxu0 0.0
    %694 = vmatmul.mubr.f32.gmra.mrb[0].mxu0 %v627
    %v695 = vpop.f32.mrb[0].mxu0
    %v696 = vadd.f32 %v624, %v695
    %v697 = vpop.f32.mrb[0].mxu0
    %698 = vdwg.mxu0
    %v699 = vsub.f32 %v355, %v696
    %v700 = vmul.f32 %v699, %v61
    %v701 = vadd.f32 %v356, %v696
    %703 = vrot.lane.b32.xlu0 %v696, 24
    %v704 = vpop.permute.xlu0 %703
    %vm706 = vcmask 386368
    %707 = vst.msk [vmem:[#allocation8] sm:$0x3] %vm706, %v704
    %708 = vrot.lane.b32.xlu0 %v696, 80
    %v709 = vpop.permute.xlu0 %708
    %vm711 = vcmask 779904
    %712 = vst.msk [vmem:[#allocation8] sm:$0x3] %vm711, %v709
    %714 = vrot.lane.b32.xlu0 %v701, 112
    %v715 = vpop.permute.xlu0 %714
    %vm717 = vcmask 58368
    %718 = vst.msk [vmem:[#allocation8] sm:$0x3] %vm717, %v715
    %720 = vrot.lane.b32.xlu0 %v700, 8
    %v721 = vpop.permute.xlu0 %720
    %vm723 = vcmask 189504
    %724 = vst.msk [vmem:[#allocation8] sm:$0x3] %vm723, %v721
    %vm725 = vcmask 1042176
    %726 = vst.msk [vmem:[#allocation8] sm:$0x3] %vm725, 0.0
    // Predicated region
    $region34: #{tpu_custom_call.1} parent=1 // pred_check
      _
    $region35: #{tpu_custom_call.1} parent=1 // pred_check_branch
      %728 = sbr.rel (0) target = $region37
    $region36: #{tpu_custom_call.1} parent=1 // pred_region
      %s730 = ssub.s32 32, 32
      %731 = vsyncadd [#allocation4], %s730
      %s733 = sshll.u32 [#allocation8], 4
      %s734 = int_to_ptr.vmem [resolvable:$true] %s733
      %736 = dma.vmem_to_hbm [thread:$0]  %s734, 32, %s5, [#allocation4]
    $region37: #{tpu_custom_call.1} parent=1 // pred_fallthru
      _
    // Predicated region
    $region38: #{tpu_custom_call.1} parent=1 // pred_check
      _
    $region39: #{tpu_custom_call.1} parent=1 // pred_check_branch
      %738 = sbr.rel (0) target = $region41
    $region40: #{tpu_custom_call.1} parent=1 // pred_region
      %739 = dma.done [#allocation4], 32
    $region41: #{tpu_custom_call.1} parent=1 // pred_fallthru
      _
    %740 = vsyncpa [#allocation3], 1
    %741 = vsyncpa [#allocation6], 1
    %742 = vsyncpa [#allocation4], 1

</llo_original>
